<compile_context>
chip_gen: v6e
topology: v6e:2x2x1
jax: 0.10.0
libtpu: 0.0.40
codegen_flags: <defaults>
</compile_context>

<pallas_src>
import functools

import jax
import jax.numpy as jnp
from jax.experimental import pallas as pl
from jax.experimental.pallas import tpu as pltpu

_FALLBACK_MAX_BYTES = 4 * 1024 * 1024  # single-full-block fallback size cap


def _copy_kernel(x_ref, o_ref):
    # Identity copy of the current (block_rows, lanes) tile.
    o_ref[...] = x_ref[...]


@functools.lru_cache(maxsize=None)
def _vmem_capacity_bytes():
    """Best-effort VMEM capacity query (conservative default = v7x 64 MiB)."""
    try:
        return int(pltpu.get_tpu_info().vmem_capacity_bytes)
    except Exception:
        pass
    try:
        kind = jax.devices()[0].device_kind.lower()
        if "v5" in kind or "v6" in kind:
            return 128 << 20
    except Exception:
        pass
    return 64 << 20


def _target_block_bytes():
    # Bigger blocks on v5e/v6e (128 MiB VMEM); 4 MiB on v7x (64 MiB VMEM).
    return (8 << 20) if _vmem_capacity_bytes() >= (96 << 20) else (4 << 20)


def _pick_block_rows(rows, target_rows, sub_mult):
    """Choose block_rows: multiple of sub_mult (or full rows), prefer an exact
    divisor of rows (unmasked stores), and >=2 grid steps for mid-size arrays
    so both v7x TensorCores get work."""
    if rows <= target_rows:
        if rows >= 2 * sub_mult:
            half = -(-rows // 2)                       # ceil(rows / 2)
            br = -(-half // sub_mult) * sub_mult        # round up to sub_mult
            if br < rows:
                lo = max(sub_mult - 1, br - 16 * sub_mult)
                for cand in range(br, lo, -sub_mult):
                    if rows % cand == 0:
                        return cand
                return br
        return rows  # single full block (always legal)
    br = max(sub_mult, (target_rows // sub_mult) * sub_mult)
    lo = max(sub_mult - 1, br - 64 * sub_mult)
    for cand in range(br, lo, -sub_mult):
        if rows % cand == 0:
            return cand
    return br  # Pallas masks the partial tail block


@functools.lru_cache(maxsize=None)
def _build_view_fn(in_shape, dtype_name, out_shape):
    """Build (once per signature) a jitted Pallas-backed view function."""
    dtype = jnp.dtype(dtype_name)
    itemsize = int(dtype.itemsize)
    total = 1
    for s in in_shape:
        total *= int(s)

    if total == 0:
        return jax.jit(lambda x: jnp.reshape(x, out_shape))

    if total % 128 != 0:
        if total * itemsize > _FALLBACK_MAX_BYTES:
            # TODO(synk): huge non-128-divisible view -> pure metadata reshape
            # (no clean lane-dense tiling without extra HBM passes).
            return jax.jit(lambda x: jnp.reshape(x, out_shape))
        # Small non-divisible total: one full-extent block, no padding.
        lanes, rows, block_rows = total, 1, 1
    else:
        lanes = 128
        for cand in (1024, 512, 256, 128):
            if total % cand == 0:
                lanes = cand
                break
        rows = total // lanes
        sub_mult = max(8, 32 // itemsize)  # 8 (4B), 16 (2B), 32 (1B)
        target_rows = max(
            sub_mult,
            (_target_block_bytes() // (lanes * itemsize)) // sub_mult * sub_mult,
        )
        block_rows = _pick_block_rows(rows, target_rows, sub_mult)

    grid = (pl.cdiv(rows, block_rows),)
    block_bytes = block_rows * lanes * itemsize
    # 2 pipeline buffers x (in + out) x block, plus slack; ceiling is
    # generation-aware (crowding the 64 MiB v7x VMEM buys nothing here).
    vmem_ceiling = (64 << 20) if _vmem_capacity_bytes() >= (96 << 20) else (32 << 20)
    vmem_limit = int(min(max(4 * block_bytes + (2 << 20), 16 << 20), vmem_ceiling))

    copy = pl.pallas_call(
        _copy_kernel,
        out_shape=jax.ShapeDtypeStruct((rows, lanes), dtype),
        grid_spec=pltpu.PrefetchScalarGridSpec(
            num_scalar_prefetch=0,
            grid=grid,
            in_specs=[pl.BlockSpec((block_rows, lanes), lambda i: (i, 0))],
            out_specs=pl.BlockSpec((block_rows, lanes), lambda i: (i, 0)),
        ),
        compiler_params=pltpu.CompilerParams(
            dimension_semantics=("parallel",),
            vmem_limit_bytes=vmem_limit,
        ),
        cost_estimate=pl.CostEstimate(
            flops=0,
            transcendentals=0,
            bytes_accessed=2 * rows * lanes * itemsize,
        ),
    )

    def run(x):
        x2d = x.reshape(rows, lanes)       # metadata only
        out2d = copy(x2d)                  # single HBM read + write
        return out2d.reshape(out_shape)    # metadata only

    return jax.jit(run)


def view_forward(x, *shape):
    """Pallas-backed equivalent of torch View(*shape).forward(x)."""
    total = int(x.size)

    # Resolve -1 in the target shape (same semantics as torch .view).
    shape = [int(s) for s in shape]
    if -1 in shape:
        idx = shape.index(-1)
        known = 1
        for j, s in enumerate(shape):
            if j != idx:
                known *= s
        if known == 0 or total % known != 0:
            raise ValueError(f"cannot resolve -1 in view shape {tuple(shape)} "
                             f"for {total} elements")
        shape[idx] = total // known
    out_shape = tuple(shape)

    prod = 1
    for s in out_shape:
        prod *= s
    if prod != total:
        raise ValueError(f"view shape {out_shape} incompatible with input of "
                         f"{total} elements")

    fn = _build_view_fn(tuple(int(d) for d in x.shape),
                        jnp.dtype(x.dtype).name, out_shape)
    return fn(x)


class View:
    """Mirror of the PyTorch nn.Module."""

    def __init__(self, *shape):
        self.shape = shape

    def __call__(self, x):
        return view_forward(x, *self.shape)


if __name__ == "__main__":
    key = jax.random.PRNGKey(0)

    # Small NCHW-like input consistent with EfficientNet usage:
    # View(batch, -1) flattens per-sample features before the classifier.
    x = jax.random.normal(key, (2, 4, 16, 16), dtype=jnp.float32)
    view = View(2, -1)
    out = jax.block_until_ready(view(x))

    ref = x.reshape(2, -1)
    assert out.shape == ref.shape, (out.shape, ref.shape)
    assert out.dtype == ref.dtype
    assert bool(jnp.all(out == ref))

    # Second call hits the lru_cache'd jitted function (no retrace).
    out_again = jax.block_until_ready(view(x))
    assert bool(jnp.all(out_again == ref))

    # Exercise the non-128-divisible path (single full-extent block, no pad).
    x2 = jax.random.normal(jax.random.PRNGKey(1), (2, 3, 5, 7), dtype=jnp.float32)
    out2 = jax.block_until_ready(view_forward(x2, 2, -1))
    ref2 = x2.reshape(2, -1)
    assert out2.shape == ref2.shape
    assert bool(jnp.all(out2 == ref2))

    print("KERNEL_OK")
</pallas_src>

<mosaic_0001>
module attributes {stable_mosaic.version = 11 : i64} {
  func.func @_copy_kernel(%arg0: i32, %arg1: memref<2x1024xf32, #tpu.memory_space<vmem>>, %arg2: memref<2x1024xf32, #tpu.memory_space<vmem>>) attributes {dimension_semantics = [#tpu.dimension_semantics<parallel>], iteration_bounds = array<i64: 1>, scalar_prefetch = 0 : i64, scratch_operands = 0 : i64, tpu.core_type = #tpu.core_type<tc>, window_params = [{transform_indices = @transform_0, window_bounds = array<i64: 2, 1024>}, {transform_indices = @transform_1, window_bounds = array<i64: 2, 1024>}]} {
    %c0 = arith.constant 0 : index
    %c0_0 = arith.constant 0 : index
    %0 = vector.load %arg1[%c0, %c0_0] : memref<2x1024xf32, #tpu.memory_space<vmem>>, vector<2x1024xf32>
    %c0_1 = arith.constant 0 : index
    %c0_2 = arith.constant 0 : index
    %1 = vector.load %arg2[%c0_1, %c0_2] : memref<2x1024xf32, #tpu.memory_space<vmem>>, vector<2x1024xf32>
    tpu.vector_store %arg2[%c0_1, %c0_2], %0 {strides = array<i32>} : memref<2x1024xf32, #tpu.memory_space<vmem>>, vector<2x1024xf32>,
    return
  }
  func.func @transform_0(%arg0: i32) -> (i32, i32) {
    %c0_i32 = arith.constant 0 : i32
    %c0_i32_0 = arith.constant 0 : i32
    return %arg0, %c0_i32 : i32, i32
  }
  func.func @transform_1(%arg0: i32) -> (i32, i32) {
    %c0_i32 = arith.constant 0 : i32
    %c0_i32_0 = arith.constant 0 : i32
    return %arg0, %c0_i32 : i32, i32
  }
}

</mosaic_0001>

<llo_original>
// kernel: run.1
$region0: #{run.1}
  #allocation0 [shape = 'u32[]', space=smem, size = 0x4, offset = 0x4, fixed_abs, tag = 'smem constant byte address 0x4 - core index']
  #allocation1 [shape = 'u32[144,128]{1,0:T(1,128)}', space=vmem, size = 0x12000, scoped, tag = 'internal scratch']
  %s0 = inlined_call_operand.vmem [shape: f32[2,1024], index: 0, kind: input, shape index: {}]
  %s1 = inlined_call_operand.hbm [shape: f32[2,1024], index: 1, kind: output, shape index: {}]
  %s2 = sld [smem:[#allocation0]]
  $region14: #{run.1} parent=0
    _
  %s4 = ssub.s32 1, %s2
  %s5 = scalar_select 0, %s4, %s2
  $region1: #{run.1} parent=0
    #allocation2 [shape = 'u8[8192]{0}', space=vmem, size = 0x2000, scoped, tag = 'output window, operand 0, single buffered']
    #allocation3 [shape = 's32[1]{0}', space=sflag, size = 0x4, scoped, tag = 'scoped memory for run.1']
    %6 = vsyncpa [#allocation3], 0
    // Predicated region
    $region2: #{run.1} parent=1 // pred_check
      _
    $region3: #{run.1} parent=1 // pred_check_branch
      %8 = sbr.rel (0) target = $region5
    $region4: #{run.1} parent=1 // pred_region
      _
    $region5: #{run.1} parent=1 // pred_fallthru
      _
    %v9 = vld [vmem:[%s0] sm:$0xff]
    %v10 = vld [vmem:[%s0 + $0x8] sm:$0xff]
    %11 = vst [vmem:[#allocation2] sm:$0xff] %v9
    %12 = vst [vmem:[#allocation2 + $0x8] sm:$0xff] %v10
    // Predicated region
    $region6: #{run.1} parent=1 // pred_check
      _
    $region7: #{run.1} parent=1 // pred_check_branch
      %14 = sbr.rel (0) target = $region9
    $region8: #{run.1} parent=1 // pred_region
      %s16 = ssub.s32 256, 256
      %17 = vsyncadd [#allocation3], %s16
      %s19 = sshll.u32 [#allocation2], 4
      %s20 = int_to_ptr.vmem [resolvable:$true] %s19
      %22 = dma.vmem_to_hbm [thread:$0]  %s20, 256, %s1, [#allocation3]
    $region9: #{run.1} parent=1 // pred_fallthru
      _
    // Predicated region
    $region10: #{run.1} parent=1 // pred_check
      _
    $region11: #{run.1} parent=1 // pred_check_branch
      %24 = sbr.rel (0) target = $region13
    $region12: #{run.1} parent=1 // pred_region
      %25 = dma.done [#allocation3], 256
    $region13: #{run.1} parent=1 // pred_fallthru
      _
    %26 = vsyncpa [#allocation3], 1

</llo_original>
